<compile_context>
chip_gen: v6e
topology: v6e:2x2x1
jax: 0.10.0
libtpu: 0.0.40
codegen_flags: <defaults>
</compile_context>

<pallas_src>
import math
import functools

import jax
import jax.numpy as jnp
from jax import lax
from jax.experimental import pallas as pl
from jax.experimental.pallas import tpu as pltpu


# ----------------------------------------------------------------------------
# tiling helpers
# ----------------------------------------------------------------------------

def _row_tile(M, preferred=256):
    """Sublane (row) tile: a multiple of 8 dividing M, else the full dim."""
    if M <= preferred:
        return M
    if M % 8 != 0:
        return M
    t = preferred
    while M % t != 0:
        t -= 8
    return t


def _lane_tile(N, preferred=512):
    """Lane tile: a multiple of 128 dividing N, else the full dim."""
    if N <= preferred:
        return N
    if N % 128 != 0:
        return N
    t = preferred
    while N % t != 0:
        t -= 128
    return t


def _gelu(y):
    # exact (erf) GELU, matching torch.nn.GELU default
    return 0.5 * y * (1.0 + lax.erf(y * (1.0 / math.sqrt(2.0))))


# ----------------------------------------------------------------------------
# Pallas kernels
# ----------------------------------------------------------------------------

def _matmul_kernel(x_ref, w_ref, b_ref, o_ref, acc_ref, *, activation):
    @pl.when(pl.program_id(2) == 0)
    def _():
        acc_ref[...] = jnp.zeros_like(acc_ref)

    acc_ref[...] += jnp.dot(x_ref[...], w_ref[...], preferred_element_type=jnp.float32)

    @pl.when(pl.program_id(2) == pl.num_programs(2) - 1)
    def _():
        y = acc_ref[...] + b_ref[...]
        if activation == "gelu":
            y = _gelu(y)
        o_ref[...] = y


def linear_pallas(x2d, w, b, activation=None):
    """x2d: [M, K] @ w: [K, N] + b -> [M, N]; tiled (M, N, K) grid with f32 VMEM accumulator."""
    M, K = x2d.shape
    N = w.shape[1]
    tm, tn, tk = _row_tile(M), _lane_tile(N), _lane_tile(K)
    kernel = functools.partial(_matmul_kernel, activation=activation)
    cost = pl.CostEstimate(
        flops=2 * M * K * N,
        transcendentals=(M * N if activation == "gelu" else 0),
        bytes_accessed=4 * (M * K + K * N + M * N),
    )
    return pl.pallas_call(
        kernel,
        out_shape=jax.ShapeDtypeStruct((M, N), jnp.float32),
        grid=(M // tm, N // tn, K // tk),
        in_specs=[
            pl.BlockSpec((tm, tk), lambda i, j, k: (i, k)),
            pl.BlockSpec((tk, tn), lambda i, j, k: (k, j)),
            pl.BlockSpec((1, tn), lambda i, j, k: (0, j)),
        ],
        out_specs=pl.BlockSpec((tm, tn), lambda i, j, k: (i, j)),
        scratch_shapes=[pltpu.VMEM((tm, tn), jnp.float32)],
        compiler_params=pltpu.CompilerParams(
            dimension_semantics=("parallel", "parallel", "arbitrary")),
        cost_estimate=cost,
    )(x2d, w, b.reshape(1, N))


def _ln_linear_kernel(x_ref, g_ref, bta_ref, w_ref, b_ref, o_ref, *, eps, activation):
    x = x_ref[...]
    mean = jnp.mean(x, axis=-1, keepdims=True)
    var = jnp.mean((x - mean) ** 2, axis=-1, keepdims=True)
    xn = (x - mean) * lax.rsqrt(var + eps)
    xn = xn * g_ref[...] + bta_ref[...]
    y = jnp.dot(xn, w_ref[...], preferred_element_type=jnp.float32) + b_ref[...]
    if activation == "gelu":
        y = _gelu(y)
    o_ref[...] = y


def ln_linear_pallas(x2d, gamma, beta, w, b, activation=None, eps=1e-6):
    """Fused LayerNorm(x) @ w + b (+gelu); tiled over rows."""
    M, D = x2d.shape
    N = w.shape[1]
    tm = _row_tile(M)
    kernel = functools.partial(_ln_linear_kernel, eps=eps, activation=activation)
    return pl.pallas_call(
        kernel,
        out_shape=jax.ShapeDtypeStruct((M, N), jnp.float32),
        grid=(M // tm,),
        in_specs=[
            pl.BlockSpec((tm, D), lambda i: (i, 0)),
            pl.BlockSpec((1, D), lambda i: (0, 0)),
            pl.BlockSpec((1, D), lambda i: (0, 0)),
            pl.BlockSpec((D, N), lambda i: (0, 0)),
            pl.BlockSpec((1, N), lambda i: (0, 0)),
        ],
        out_specs=pl.BlockSpec((tm, N), lambda i: (i, 0)),
        compiler_params=pltpu.CompilerParams(dimension_semantics=("parallel",)),
    )(x2d, gamma.reshape(1, D), beta.reshape(1, D), w, b.reshape(1, N))


def _linear_residual_kernel(x_ref, w_ref, b_ref, r_ref, o_ref):
    o_ref[...] = (r_ref[...]
                  + jnp.dot(x_ref[...], w_ref[...], preferred_element_type=jnp.float32)
                  + b_ref[...])


def linear_residual_pallas(x2d, w, b, resid2d):
    """Fused (x @ w + b) + residual; tiled over rows."""
    M, K = x2d.shape
    N = w.shape[1]
    tm = _row_tile(M)
    return pl.pallas_call(
        _linear_residual_kernel,
        out_shape=jax.ShapeDtypeStruct((M, N), jnp.float32),
        grid=(M // tm,),
        in_specs=[
            pl.BlockSpec((tm, K), lambda i: (i, 0)),
            pl.BlockSpec((K, N), lambda i: (0, 0)),
            pl.BlockSpec((1, N), lambda i: (0, 0)),
            pl.BlockSpec((tm, N), lambda i: (i, 0)),
        ],
        out_specs=pl.BlockSpec((tm, N), lambda i: (i, 0)),
        compiler_params=pltpu.CompilerParams(dimension_semantics=("parallel",)),
    )(x2d, w, b.reshape(1, N), resid2d)


def _mlp_block_kernel(x_ref, g_ref, bta_ref, w1_ref, b1_ref, w2_ref, b2_ref, o_ref, *, eps):
    x = x_ref[...]
    mean = jnp.mean(x, axis=-1, keepdims=True)
    var = jnp.mean((x - mean) ** 2, axis=-1, keepdims=True)
    xn = (x - mean) * lax.rsqrt(var + eps)
    xn = xn * g_ref[...] + bta_ref[...]
    h = _gelu(jnp.dot(xn, w1_ref[...], preferred_element_type=jnp.float32) + b1_ref[...])
    y = jnp.dot(h, w2_ref[...], preferred_element_type=jnp.float32) + b2_ref[...]
    o_ref[...] = x + y


def mlp_block_pallas(x2d, gamma, beta, w1, b1, w2, b2, eps=1e-6):
    """Fused x + fc2(gelu(fc1(LN(x)))); tiled over rows, both weights resident in VMEM."""
    M, D = x2d.shape
    H = w1.shape[1]
    tm = _row_tile(M)
    kernel = functools.partial(_mlp_block_kernel, eps=eps)
    return pl.pallas_call(
        kernel,
        out_shape=jax.ShapeDtypeStruct((M, D), jnp.float32),
        grid=(M // tm,),
        in_specs=[
            pl.BlockSpec((tm, D), lambda i: (i, 0)),
            pl.BlockSpec((1, D), lambda i: (0, 0)),
            pl.BlockSpec((1, D), lambda i: (0, 0)),
            pl.BlockSpec((D, H), lambda i: (0, 0)),
            pl.BlockSpec((1, H), lambda i: (0, 0)),
            pl.BlockSpec((H, D), lambda i: (0, 0)),
            pl.BlockSpec((1, D), lambda i: (0, 0)),
        ],
        out_specs=pl.BlockSpec((tm, D), lambda i: (i, 0)),
        compiler_params=pltpu.CompilerParams(dimension_semantics=("parallel",)),
    )(x2d, gamma.reshape(1, D), beta.reshape(1, D),
      w1, b1.reshape(1, H), w2, b2.reshape(1, D))


def _layernorm_kernel(x_ref, g_ref, b_ref, o_ref, *, eps):
    x = x_ref[...]
    mean = jnp.mean(x, axis=-1, keepdims=True)
    var = jnp.mean((x - mean) ** 2, axis=-1, keepdims=True)
    o_ref[...] = (x - mean) * lax.rsqrt(var + eps) * g_ref[...] + b_ref[...]


def layernorm_pallas(x, gamma, beta, eps=1e-6):
    """LayerNorm over last dim (biased variance, PyTorch semantics); tiled over rows."""
    orig_shape = x.shape
    D = orig_shape[-1]
    x2d = x.reshape(-1, D)
    M = x2d.shape[0]
    tm = _row_tile(M)
    kernel = functools.partial(_layernorm_kernel, eps=eps)
    y = pl.pallas_call(
        kernel,
        out_shape=jax.ShapeDtypeStruct((M, D), jnp.float32),
        grid=(M // tm,),
        in_specs=[
            pl.BlockSpec((tm, D), lambda i: (i, 0)),
            pl.BlockSpec((1, D), lambda i: (0, 0)),
            pl.BlockSpec((1, D), lambda i: (0, 0)),
        ],
        out_specs=pl.BlockSpec((tm, D), lambda i: (i, 0)),
        compiler_params=pltpu.CompilerParams(dimension_semantics=("parallel",)),
    )(x2d, gamma.reshape(1, D), beta.reshape(1, D))
    return y.reshape(orig_shape)


def _attn_kernel(q_ref, k_ref, v_ref, o_ref, a_ref, *, scale):
    q = q_ref[0] * scale                 # [H, T, Dh]  (scale folded onto q, not the [T,T] scores)
    k = k_ref[0]
    v = v_ref[0]
    # contract last dims directly (batched over heads) -- no k.T materialization
    s = jnp.einsum("hqd,hkd->hqk", q, k, preferred_element_type=jnp.float32)
    s = s - jnp.max(s, axis=-1, keepdims=True)
    e = jnp.exp(s)
    p = e * pl.reciprocal(jnp.sum(e, axis=-1, keepdims=True), approx=True)
    a_ref[0] = p
    o_ref[0] = jnp.einsum("hqk,hkd->hqd", p, v, preferred_element_type=jnp.float32)


def attention_pallas(q, k, v):
    """q,k,v: [B, H, T, Dh] -> (out [B,H,T,Dh], attn weights [B,H,T,T]).
    Grid over batch only; all heads are batched into one block (fills MXU/lanes,
    removes the per-(batch,head) grid-step overhead)."""
    B, H, T, Dh = q.shape
    scale = Dh ** -0.5
    kernel = functools.partial(_attn_kernel, scale=scale)
    cost = pl.CostEstimate(
        flops=4 * B * H * T * T * Dh,
        transcendentals=B * H * T * T,
        bytes_accessed=4 * (4 * B * H * T * Dh + B * H * T * T),
    )
    out, attn = pl.pallas_call(
        kernel,
        out_shape=(
            jax.ShapeDtypeStruct((B, H, T, Dh), jnp.float32),
            jax.ShapeDtypeStruct((B, H, T, T), jnp.float32),
        ),
        grid=(B,),
        in_specs=[
            pl.BlockSpec((1, H, T, Dh), lambda b: (b, 0, 0, 0)),
            pl.BlockSpec((1, H, T, Dh), lambda b: (b, 0, 0, 0)),
            pl.BlockSpec((1, H, T, Dh), lambda b: (b, 0, 0, 0)),
        ],
        out_specs=(
            pl.BlockSpec((1, H, T, Dh), lambda b: (b, 0, 0, 0)),
            pl.BlockSpec((1, H, T, T), lambda b: (b, 0, 0, 0)),
        ),
        compiler_params=pltpu.CompilerParams(dimension_semantics=("parallel",)),
        cost_estimate=cost,
    )(q, k, v)
    return out, attn


def _loss_kernel(x_ref, p_ref, m_ref, o_ref, acc_ref):
    i = pl.program_id(0)

    @pl.when(i == 0)
    def _():
        acc_ref[0] = jnp.float32(0.0)
        acc_ref[1] = jnp.float32(0.0)

    diff = p_ref[...] - x_ref[...]                              # [tm, D]
    per_tok = jnp.mean(diff * diff, axis=-1, keepdims=True)     # [tm, 1]
    m = m_ref[...]                                              # [tm, 1]
    acc_ref[0] = acc_ref[0] + jnp.sum(per_tok * m)
    acc_ref[1] = acc_ref[1] + jnp.sum(m)

    @pl.when(i == pl.num_programs(0) - 1)
    def _():
        o_ref[0, 0] = acc_ref[0] / acc_ref[1]


def masked_mse_loss_pallas(x, pred, mask):
    """forward_loss with norm_loss=False, keep_batch=False -> scalar.
    Tiled row-grid reduction with SMEM scalar accumulators."""
    B, L, D = x.shape
    M = B * L
    x2d = x.reshape(M, D)
    p2d = pred.reshape(M, D)
    m2d = mask.reshape(M, 1)
    tm = _row_tile(M)
    out = pl.pallas_call(
        _loss_kernel,
        out_shape=jax.ShapeDtypeStruct((1, 1), jnp.float32),
        grid=(M // tm,),
        in_specs=[
            pl.BlockSpec((tm, D), lambda i: (i, 0)),
            pl.BlockSpec((tm, D), lambda i: (i, 0)),
            pl.BlockSpec((tm, 1), lambda i: (i, 0)),
        ],
        out_specs=pl.BlockSpec((1, 1), lambda i: (0, 0)),
        scratch_shapes=[pltpu.SMEM((2,), jnp.float32)],
        compiler_params=pltpu.CompilerParams(dimension_semantics=("arbitrary",)),
    )(x2d, p2d, m2d)
    return out[0, 0]


# ----------------------------------------------------------------------------
# Model pieces (JAX glue around the Pallas kernels)
# ----------------------------------------------------------------------------

def positional_encoding(d_model, max_len):
    position = jnp.arange(max_len, dtype=jnp.float32)[:, None]
    div_term = jnp.exp(
        jnp.arange(0, d_model, 2, dtype=jnp.float32) * (-math.log(10000.0) / d_model)
    )
    pe = jnp.zeros((1, max_len, d_model), jnp.float32)
    pe = pe.at[0, :, 0::2].set(jnp.sin(position * div_term))
    pe = pe.at[0, :, 1::2].set(jnp.cos(position * div_term))
    return pe


def xavier_linear(key, fan_in, fan_out):
    bound = math.sqrt(6.0 / (fan_in + fan_out))
    w = jax.random.uniform(key, (fan_in, fan_out), jnp.float32, -bound, bound)
    b = jnp.zeros((fan_out,), jnp.float32)
    return w, b


def make_block_params(key, dim, mlp_ratio):
    hidden = int(dim * mlp_ratio)
    k0, k1, k2, k3 = jax.random.split(key, 4)
    qkv_w, qkv_b = xavier_linear(k0, dim, 3 * dim)
    proj_w, proj_b = xavier_linear(k1, dim, dim)
    fc1_w, fc1_b = xavier_linear(k2, dim, hidden)
    fc2_w, fc2_b = xavier_linear(k3, hidden, dim)
    return dict(
        norm1_w=jnp.ones((dim,), jnp.float32), norm1_b=jnp.zeros((dim,), jnp.float32),
        qkv_w=qkv_w, qkv_b=qkv_b, proj_w=proj_w, proj_b=proj_b,
        norm2_w=jnp.ones((dim,), jnp.float32), norm2_b=jnp.zeros((dim,), jnp.float32),
        fc1_w=fc1_w, fc1_b=fc1_b, fc2_w=fc2_w, fc2_b=fc2_b,
    )


def init_params(key, cfg):
    E, Dd = cfg["embed_dim"], cfg["decoder_embed_dim"]
    F, A, L = cfg["feature_dim"], cfg["action_shape"], cfg["seq_len"]
    n_keys = 4 + cfg["depth"] + cfg["decoder_depth"]
    keys = jax.random.split(key, n_keys)
    ki = iter(keys)

    enc_w, enc_b = xavier_linear(next(ki), F, E)
    act_w, act_b = xavier_linear(next(ki), A, E)
    blocks = [make_block_params(next(ki), E, cfg["mlp_ratio"]) for _ in range(cfg["depth"])]
    dec_embed_w, dec_embed_b = xavier_linear(next(ki), E, Dd)
    dec_blocks = [make_block_params(next(ki), Dd, cfg["mlp_ratio"]) for _ in range(cfg["decoder_depth"])]
    dec_pred_w, dec_pred_b = xavier_linear(next(ki), Dd, E)

    return dict(
        enc_w=enc_w, enc_b=enc_b,
        act_w=act_w, act_b=act_b,
        pe_after=positional_encoding(E, 2 * L + 1),
        blocks=blocks,
        norm_w=jnp.ones((E,), jnp.float32), norm_b=jnp.zeros((E,), jnp.float32),
        mask_token=jnp.zeros((1, 1, Dd), jnp.float32),
        dec_embed_w=dec_embed_w, dec_embed_b=dec_embed_b,
        pe_dec=positional_encoding(Dd, 2 * L + 1),
        dec_blocks=dec_blocks,
        dec_norm_w=jnp.ones((Dd,), jnp.float32), dec_norm_b=jnp.zeros((Dd,), jnp.float32),
        dec_pred_w=dec_pred_w, dec_pred_b=dec_pred_b,
    )


def block_forward(x, p, num_heads):
    """Standard pre-LN ViT block returning (x_out, attention weights [B,H,T,T])."""
    B, T, E = x.shape
    Dh = E // num_heads
    x2d = x.reshape(B * T, E)

    # fused LayerNorm -> QKV projection
    qkv = ln_linear_pallas(x2d, p["norm1_w"], p["norm1_b"], p["qkv_w"], p["qkv_b"])
    qkv = qkv.reshape(B, T, 3, num_heads, Dh)
    qkv = jnp.transpose(qkv, (2, 0, 3, 1, 4))      # [3, B, H, T, Dh]
    q, k, v = qkv[0], qkv[1], qkv[2]

    attn_out, attn = attention_pallas(q, k, v)     # [B,H,T,Dh], [B,H,T,T]
    attn_out = jnp.transpose(attn_out, (0, 2, 1, 3)).reshape(B * T, E)

    # fused attention output projection + residual add
    x = linear_residual_pallas(attn_out, p["proj_w"], p["proj_b"], x2d).reshape(B, T, E)

    # fused LayerNorm -> fc1(gelu) -> fc2 + residual
    x = mlp_block_pallas(x.reshape(B * T, E), p["norm2_w"], p["norm2_b"],
                         p["fc1_w"], p["fc1_b"], p["fc2_w"], p["fc2_b"]).reshape(B, T, E)
    return x, attn


def random_masking(x, mask_ratio, key):
    N, L, D = x.shape
    len_keep = int(L * (1 - mask_ratio))
    noise = jax.random.uniform(key, (N, L))
    ids_shuffle = jnp.argsort(noise, axis=1)
    ids_restore = jnp.argsort(ids_shuffle, axis=1)
    ids_keep = ids_shuffle[:, :len_keep]
    x_masked = jnp.take_along_axis(x, ids_keep[:, :, None], axis=1)
    mask = jnp.ones((N, L), jnp.float32)
    mask = mask.at[:, :len_keep].set(0.0)
    mask = jnp.take_along_axis(mask, ids_restore, axis=1)
    return x_masked, mask, ids_restore


def bert_ratio_mask_forward(params, x, seq_act, seq_next_obs, mask_key, cfg):
    """Full forward: returns (loss, summed_attn, attn_all) like the PyTorch module
    (use_cls=False, use_next_obs=0, norm_loss=False, keep_batch=False)."""
    del seq_next_obs  # use_next_obs = 0
    B, L, F = x.shape
    E, Dd = cfg["embed_dim"], cfg["decoder_embed_dim"]

    # ---- forward_encoder ----
    x_emb = linear_pallas(x.reshape(B * L, F), params["enc_w"], params["enc_b"]).reshape(B, L, E)
    a_emb = linear_pallas(seq_act.reshape(B * L, -1), params["act_w"], params["act_b"]).reshape(B, L, E)
    # interleave [x_0, a_0, x_1, a_1, ...] == torch.cat of per-step slices
    cat = jnp.stack([x_emb, a_emb], axis=2).reshape(B, 2 * L, E)
    cat = cat + params["pe_after"][:, : 2 * L]

    attn_all = []
    for p in params["blocks"]:
        cat, attn = block_forward(cat, p, cfg["num_heads"])
        attn_all.append(attn)
    attn_stack = jnp.stack(attn_all, axis=0)                      # [depth, B, H, T, T]
    attn_return = jnp.mean(jnp.mean(attn_stack, axis=0), axis=1)  # [B, T, T]
    z = layernorm_pallas(cat, params["norm_w"], params["norm_b"])

    # ---- forward (masking of encoder output) ----
    x_no_cls = z[:, 1:, :]
    cls_token = z[:, :1, :]
    z_mask, mask, ids_restore = random_masking(x_no_cls, cfg["mask_ratio"], mask_key)
    latent = jnp.concatenate([cls_token, z_mask], axis=1)

    # ---- forward_decoder (use_cls=False branch) ----
    Bl, Tl, _ = latent.shape
    xd = linear_pallas(latent.reshape(Bl * Tl, E), params["dec_embed_w"], params["dec_embed_b"])
    xd = xd.reshape(Bl, Tl, Dd)
    Lr = ids_restore.shape[1]
    mask_tokens = jnp.broadcast_to(params["mask_token"], (Bl, Lr - Tl, Dd))
    x_ = jnp.concatenate([xd, mask_tokens], axis=1)
    xd = jnp.take_along_axis(x_, ids_restore[:, :, None], axis=1)
    xd = xd + params["pe_dec"][:, :Lr]
    for p in params["dec_blocks"]:
        xd, _ = block_forward(xd, p, cfg["decoder_num_heads"])
    xd = layernorm_pallas(xd, params["dec_norm_w"], params["dec_norm_b"])
    pred = linear_pallas(xd.reshape(B * Lr, Dd), params["dec_pred_w"], params["dec_pred_b"])
    pred = pred.reshape(B, Lr, E)

    # ---- forward_loss (norm_loss=False, keep_batch=False) ----
    loss = masked_mse_loss_pallas(x_no_cls, pred, mask)

    summed_attn = attn_return * cfg["attn_ratio_weight"]
    return loss, summed_attn, attn_stack


# ----------------------------------------------------------------------------
# Main
# ----------------------------------------------------------------------------

if __name__ == "__main__":
    cfg = dict(
        seq_len=8,
        feature_dim=16,
        embed_dim=32,
        depth=2,
        num_heads=4,
        decoder_embed_dim=16,
        decoder_num_heads=2,
        decoder_depth=1,
        mlp_ratio=4.0,
        mask_ratio=0.7,
        action_shape=5,
        attn_ratio_weight=1.0,
    )
    B = 2

    key = jax.random.PRNGKey(0)
    k_param, k_x, k_a, k_n, k_mask = jax.random.split(key, 5)
    params = init_params(k_param, cfg)

    x = jax.random.normal(k_x, (B, cfg["seq_len"], cfg["feature_dim"]), jnp.float32)
    seq_act = jax.random.normal(k_a, (B, cfg["seq_len"], cfg["action_shape"]), jnp.float32)
    seq_next_obs = jax.random.normal(k_n, (B, cfg["seq_len"], cfg["feature_dim"]), jnp.float32)

    loss, summed_attn, attn_all = bert_ratio_mask_forward(
        params, x, seq_act, seq_next_obs, k_mask, cfg
    )
    jax.block_until_ready((loss, summed_attn, attn_all))

    assert loss.shape == ()
    assert summed_attn.shape == (B, 2 * cfg["seq_len"], 2 * cfg["seq_len"])
    assert attn_all.shape == (cfg["depth"], B, cfg["num_heads"], 2 * cfg["seq_len"], 2 * cfg["seq_len"])
    print("KERNEL_OK")
</pallas_src>

<mosaic_0001>
module attributes {stable_mosaic.version = 11 : i64} {
  func.func @_matmul_kernel(%arg0: i32, %arg1: i32, %arg2: i32, %arg3: memref<16x16xf32, #tpu.memory_space<vmem>>, %arg4: memref<16x32xf32, #tpu.memory_space<vmem>>, %arg5: memref<1x32xf32, #tpu.memory_space<vmem>>, %arg6: memref<16x32xf32, #tpu.memory_space<vmem>>, %arg7: memref<16x32xf32, #tpu.memory_space<vmem>>) attributes {dimension_semantics = [#tpu.dimension_semantics<parallel>, #tpu.dimension_semantics<parallel>, #tpu.dimension_semantics<arbitrary>], iteration_bounds = array<i64: 1, 1, 1>, scalar_prefetch = 0 : i64, scratch_operands = 1 : i64, tpu.core_type = #tpu.core_type<tc>, window_params = [{transform_indices = @transform_0, window_bounds = array<i64: 16, 16>}, {transform_indices = @transform_1, window_bounds = array<i64: 16, 32>}, {transform_indices = @transform_2, window_bounds = array<i64: 1, 32>}, {transform_indices = @transform_3, window_bounds = array<i64: 16, 32>}]} {
    %c0_i32 = arith.constant 0 : i32
    %0 = arith.cmpi eq, %arg2, %c0_i32 : i32
    %1 = arith.extui %0 : i1 to i32
    %c0_i32_0 = arith.constant 0 : i32
    %2 = arith.cmpi ne, %1, %c0_i32_0 : i32
    scf.if %2 {
      %cst_10 = arith.constant 0.000000e+00 : f32
      %12 = vector.broadcast %cst_10 : f32 to vector<16x32xf32>
      %c0_11 = arith.constant 0 : index
      %c0_12 = arith.constant 0 : index
      %13 = vector.load %arg7[%c0_11, %c0_12] : memref<16x32xf32, #tpu.memory_space<vmem>>, vector<16x32xf32>
      tpu.vector_store %arg7[%c0_11, %c0_12], %12 {strides = array<i32>} : memref<16x32xf32, #tpu.memory_space<vmem>>, vector<16x32xf32>,
    } else {
    }
    %c0 = arith.constant 0 : index
    %c0_1 = arith.constant 0 : index
    %3 = vector.load %arg7[%c0, %c0_1] : memref<16x32xf32, #tpu.memory_space<vmem>>, vector<16x32xf32>
    %c0_2 = arith.constant 0 : index
    %c0_3 = arith.constant 0 : index
    %4 = vector.load %arg3[%c0_2, %c0_3] : memref<16x16xf32, #tpu.memory_space<vmem>>, vector<16x16xf32>
    %c0_4 = arith.constant 0 : index
    %c0_5 = arith.constant 0 : index
    %5 = vector.load %arg4[%c0_4, %c0_5] : memref<16x32xf32, #tpu.memory_space<vmem>>, vector<16x32xf32>
    %cst = arith.constant dense<0.000000e+00> : vector<16x32xf32>
    %6 = tpu.matmul %4, %5, %cst {dimension_numbers = #tpu.dot_dimension_numbers<[1], [0], [0], [1], [0, 0, 1, 1], [], []>} : vector<16x16xf32>, vector<16x32xf32>, vector<16x32xf32> -> vector<16x32xf32>
    %7 = arith.addf %3, %6 : vector<16x32xf32>
    %c0_6 = arith.constant 0 : index
    %c0_7 = arith.constant 0 : index
    %8 = vector.load %arg7[%c0_6, %c0_7] : memref<16x32xf32, #tpu.memory_space<vmem>>, vector<16x32xf32>
    tpu.vector_store %arg7[%c0_6, %c0_7], %7 {strides = array<i32>} : memref<16x32xf32, #tpu.memory_space<vmem>>, vector<16x32xf32>,
    %c0_i32_8 = arith.constant 0 : i32
    %9 = arith.cmpi eq, %arg2, %c0_i32_8 : i32
    %10 = arith.extui %9 : i1 to i32
    %c0_i32_9 = arith.constant 0 : i32
    %11 = arith.cmpi ne, %10, %c0_i32_9 : i32
    scf.if %11 {
      %c0_10 = arith.constant 0 : index
      %c0_11 = arith.constant 0 : index
      %12 = vector.load %arg7[%c0_10, %c0_11] : memref<16x32xf32, #tpu.memory_space<vmem>>, vector<16x32xf32>
      %c0_12 = arith.constant 0 : index
      %c0_13 = arith.constant 0 : index
      %13 = vector.load %arg5[%c0_12, %c0_13] : memref<1x32xf32, #tpu.memory_space<vmem>>, vector<1x32xf32>
      %14 = vector.broadcast %13 : vector<1x32xf32> to vector<16x32xf32>
      %15 = arith.addf %12, %14 : vector<16x32xf32>
      %c0_14 = arith.constant 0 : index
      %c0_15 = arith.constant 0 : index
      %16 = vector.load %arg6[%c0_14, %c0_15] : memref<16x32xf32, #tpu.memory_space<vmem>>, vector<16x32xf32>
      tpu.vector_store %arg6[%c0_14, %c0_15], %15 {strides = array<i32>} : memref<16x32xf32, #tpu.memory_space<vmem>>, vector<16x32xf32>,
    } else {
    }
    return
  }
  func.func @transform_0(%arg0: i32, %arg1: i32, %arg2: i32) -> (i32, i32) {
    %c0_i32 = arith.constant 0 : i32
    return %arg0, %arg2 : i32, i32
  }
  func.func @transform_1(%arg0: i32, %arg1: i32, %arg2: i32) -> (i32, i32) {
    %c0_i32 = arith.constant 0 : i32
    return %arg2, %arg1 : i32, i32
  }
  func.func @transform_2(%arg0: i32, %arg1: i32, %arg2: i32) -> (i32, i32) {
    %c0_i32 = arith.constant 0 : i32
    %c0_i32_0 = arith.constant 0 : i32
    return %c0_i32, %arg1 : i32, i32
  }
  func.func @transform_3(%arg0: i32, %arg1: i32, %arg2: i32) -> (i32, i32) {
    %c0_i32 = arith.constant 0 : i32
    return %arg0, %arg1 : i32, i32
  }
}

</mosaic_0001>

<llo_original>
// kernel: tpu_custom_call.1
$region0: #{tpu_custom_call.1}
  #allocation0 [shape = 'u32[]', space=smem, size = 0x4, offset = 0x4, fixed_abs, tag = 'smem constant byte address 0x4 - core index']
  #allocation1 [shape = 'u32[144,128]{1,0:T(1,128)}', space=vmem, size = 0x12000, scoped, tag = 'internal scratch']
  #allocation2 [shape = 'f32[16,32]{1,0:T(8,128)}', space=vmem, size = 0x2000, scoped, tag = 'scratch operand']
  %s0 = inlined_call_operand.hbm [shape: f32[16,16], index: 0, kind: input, shape index: {}]
  %s1 = inlined_call_operand.hbm [shape: f32[16,32], index: 1, kind: input, shape index: {}]
  %s2 = inlined_call_operand.vmem [shape: f32[1,32], index: 2, kind: input, shape index: {}]
  %s3 = inlined_call_operand.hbm [shape: f32[16,32], index: 3, kind: output, shape index: {}]
  %s4 = sld [smem:[#allocation0]]
  $region38: #{tpu_custom_call.1} parent=0
    _
  %s6 = ssub.s32 1, %s4
  %s7 = scalar_select 0, %s6, %s4
  $region1: #{tpu_custom_call.1} parent=0
    #allocation3 [shape = 'u8[8192]{0}', space=vmem, size = 0x2000, scoped, tag = 'input window, operand 0, single buffered']
    #allocation4 [shape = 's32[1]{0}', space=sflag, size = 0x4, scoped, tag = 'scoped memory for tpu_custom_call.1']
    #allocation5 [shape = 's32[1]{0}', space=sflag, size = 0x4, scoped, tag = 'scoped memory for tpu_custom_call.1']
    #allocation6 [shape = 'u8[8192]{0}', space=vmem, size = 0x2000, scoped, tag = 'input window, operand 1, single buffered']
    #allocation7 [shape = 's32[1]{0}', space=sflag, size = 0x4, scoped, tag = 'scoped memory for tpu_custom_call.1']
    #allocation8 [shape = 'u8[8192]{0}', space=vmem, size = 0x2000, scoped, tag = 'output window, operand 0, single buffered']
    %8 = vsyncpa [#allocation4], 0
    %9 = vsyncpa [#allocation7], 0
    %10 = vsyncpa [#allocation5], 0
    // Predicated region
    $region2: #{tpu_custom_call.1} parent=1 // pred_check
      _
    $region3: #{tpu_custom_call.1} parent=1 // pred_check_branch
      %12 = sbr.rel (0) target = $region5
    $region4: #{tpu_custom_call.1} parent=1 // pred_region
      %s14 = ssub.s32 256, 256
      %15 = vsyncadd [#allocation4], %s14
      %s16 = sshll.u32 [#allocation3], 4
      %s17 = int_to_ptr.vmem [resolvable:$true] %s16
      %22 = dma.hbm_to_vmem [thread:$0]  %s0, 256, %s17, [#allocation4], 128, 128, 8
    $region5: #{tpu_custom_call.1} parent=1 // pred_fallthru
      _
    // Predicated region
    $region6: #{tpu_custom_call.1} parent=1 // pred_check
      _
    $region7: #{tpu_custom_call.1} parent=1 // pred_check_branch
      %24 = sbr.rel (0) target = $region9
    $region8: #{tpu_custom_call.1} parent=1 // pred_region
      %s26 = ssub.s32 256, 256
      %27 = vsyncadd [#allocation7], %s26
      %s28 = sshll.u32 [#allocation6], 4
      %s29 = int_to_ptr.vmem [resolvable:$true] %s28
      %34 = dma.hbm_to_vmem [thread:$0]  %s1, 256, %s29, [#allocation7], 128, 128, 8
    $region9: #{tpu_custom_call.1} parent=1 // pred_fallthru
      _
    // Predicated region
    $region10: #{tpu_custom_call.1} parent=1 // pred_check
      _
    $region11: #{tpu_custom_call.1} parent=1 // pred_check_branch
      %36 = sbr.rel (0) target = $region13
    $region12: #{tpu_custom_call.1} parent=1 // pred_region
      _
    $region13: #{tpu_custom_call.1} parent=1 // pred_fallthru
      _
    // Predicated region
    $region14: #{tpu_custom_call.1} parent=1 // pred_check
      _
    $region15: #{tpu_custom_call.1} parent=1 // pred_check_branch
      %38 = sbr.rel (0) target = $region17
    $region16: #{tpu_custom_call.1} parent=1 // pred_region
      %39 = dma.done [#allocation4], 256
    $region17: #{tpu_custom_call.1} parent=1 // pred_fallthru
      _
    // Predicated region
    $region18: #{tpu_custom_call.1} parent=1 // pred_check
      _
    $region19: #{tpu_custom_call.1} parent=1 // pred_check_branch
      %41 = sbr.rel (0) target = $region21
    $region20: #{tpu_custom_call.1} parent=1 // pred_region
      %42 = dma.done [#allocation7], 256
    $region21: #{tpu_custom_call.1} parent=1 // pred_fallthru
      _
    %p43 = scmp.eq.s32.totalorder 0, 0
    // Predicated region
    $region22: #{tpu_custom_call.1} parent=1 // pred_check
      %p44 = pneg %p43
    $region23: #{tpu_custom_call.1} parent=1 // pred_check_branch
      %46 = sbr.rel (%p44) target = $region25
    $region24: #{tpu_custom_call.1} parent=1 // pred_region
      %vm47 = vcmask 261120
      %48 = vst.msk [vmem:[#allocation2] sm:$0xff] %vm47, 0.0
      %49 = vst.msk [vmem:[#allocation2 + $0x8] sm:$0xff] %vm47, 0.0
    $region25: #{tpu_custom_call.1} parent=1 // pred_fallthru
      _
    %v50 = vld [vmem:[#allocation2] sm:$0xff]
    %v51 = vld [vmem:[#allocation2 + $0x8] sm:$0xff]
    %v52 = vld [vmem:[#allocation3] sm:$0xff]
    %v53 = vld [vmem:[#allocation3 + $0x8] sm:$0xff]
    %v54 = vld [vmem:[#allocation6] sm:$0xff]
    %v55 = vld [vmem:[#allocation6 + $0x8] sm:$0xff]
    %vm56 = vcmask 130048
    %v58 = vsel %vm56, %v52, 0
    %v61 = vsel %vm56, %v53, 0
    %63 = vmatprep.subr.mxu0 0.0
    %64 = vmatpush1.msra.mxu0 0.0
    %65 = vmatprep.subr.mxu0 0.0
    %66 = vmatpush1.msra.mxu0 0.0
    %67 = vmatprep.subr.mxu0 0.0
    %68 = vmatpush1.msra.mxu0 0.0
    %69 = vmatprep.subr.mxu0 0.0
    %70 = vmatpush1.msra.mxu0 0.0
    %71 = vmatprep.subr.mxu0 0.0
    %72 = vmatpush1.msra.mxu0 0.0
    %73 = vmatprep.subr.mxu0 0.0
    %74 = vmatpush1.msra.mxu0 0.0
    %75 = vmatprep.subr.mxu0 0.0
    %76 = vmatpush1.msra.mxu0 0.0
    %77 = vmatprep.subr.mxu0 0.0
    %78 = vmatpush1.msra.mxu0 0.0
    %79 = vmatprep.subr.mxu0 0.0
    %80 = vmatpush1.msra.mxu0 0.0
    %81 = vmatprep.subr.mxu0 0.0
    %82 = vmatpush1.msra.mxu0 0.0
    %83 = vmatprep.subr.mxu0 0.0
    %84 = vmatpush1.msra.mxu0 0.0
    %85 = vmatprep.subr.mxu0 0.0
    %86 = vmatpush1.msra.mxu0 0.0
    %87 = vmatprep.subr.mxu0 0.0
    %88 = vmatpush1.msra.mxu0 0.0
    %89 = vmatprep.subr.mxu0 0.0
    %90 = vmatpush1.msra.mxu0 0.0
    %91 = vmatprep.subr.mxu0 0.0
    %92 = vmatpush1.msra.mxu0 %v55
    %93 = vmatprep.subr.mxu0 0.0
    %94 = vmatpush1.msra.mxu0 %v54
    %95 = vmatprep.subr.mxu0 0.0
    %96 = vmatpush2.msra.mxu0 0.0
    %97 = vmatprep.subr.mxu0 0.0
    %98 = vmatpush2.msra.mxu0 0.0
    %99 = vmatprep.subr.mxu0 0.0
    %100 = vmatpush2.msra.mxu0 0.0
    %101 = vmatprep.subr.mxu0 0.0
    %102 = vmatpush2.msra.mxu0 0.0
    %103 = vmatprep.subr.mxu0 0.0
    %104 = vmatpush2.msra.mxu0 0.0
    %105 = vmatprep.subr.mxu0 0.0
    %106 = vmatpush2.msra.mxu0 0.0
    %107 = vmatprep.subr.mxu0 0.0
    %108 = vmatpush2.msra.mxu0 0.0
    %109 = vmatprep.subr.mxu0 0.0
    %110 = vmatpush2.msra.mxu0 0.0
    %111 = vmatprep.subr.mxu0 0.0
    %112 = vmatpush2.msra.mxu0 0.0
    %113 = vmatprep.subr.mxu0 0.0
    %114 = vmatpush2.msra.mxu0 0.0
    %115 = vmatprep.subr.mxu0 0.0
    %116 = vmatpush2.msra.mxu0 0.0
    %117 = vmatprep.subr.mxu0 0.0
    %118 = vmatpush2.msra.mxu0 0.0
    %119 = vmatprep.subr.mxu0 0.0
    %120 = vmatpush2.msra.mxu0 0.0
    %121 = vmatprep.subr.mxu0 0.0
    %122 = vmatpush2.msra.mxu0 0.0
    %123 = vmatprep.subr.mxu0 0.0
    %124 = vmatpush2.msra.mxu0 0.0
    %125 = vmatprep.subr.mxu0 0.0
    %126 = vmatpush2.msra.mxu0 0.0
    %127 = vmatprep.mubr.f32.mxu0 0.0
    %128 = vmatmul.mubr.f32.gmra.mxu0 %v58
    %v129 = vpop.f32.mrf.mxu0
    %v130 = vadd.f32 0.0, %v129
    %v131 = vpop.f32.mrf.mxu0
    %132 = vmatprep.mubr.f32.mxu0 0.0
    %133 = vmatmul.mubr.f32.gmra.mxu0 %v61
    %v134 = vpop.f32.mrf.mxu0
    %v135 = vadd.f32 0.0, %v134
    %v136 = vpop.f32.mrf.mxu0
    %137 = vdwg.mxu0
    %v138 = vadd.f32 %v50, %v130
    %v139 = vadd.f32 %v51, %v135
    %vm140 = vcmask 261120
    %141 = vst.msk [vmem:[#allocation2] sm:$0xff] %vm140, %v138
    %142 = vst.msk [vmem:[#allocation2 + $0x8] sm:$0xff] %vm140, %v139
    // Predicated region
    $region26: #{tpu_custom_call.1} parent=1 // pred_check
      %p143 = pneg %p43
    $region27: #{tpu_custom_call.1} parent=1 // pred_check_branch
      %145 = sbr.rel (%p143) target = $region29
    $region28: #{tpu_custom_call.1} parent=1 // pred_region
      %v146 = vld [vmem:[#allocation2] sm:$0xff]
      %v147 = vld [vmem:[#allocation2 + $0x8] sm:$0xff]
      %v148 = vld [vmem:[%s2] sm:$0x1]
      %v150 = vlaneseq
      %v151 = vshrl.u32 %v150, 7
      %v152 = vsub.s32 0, %v151
      %v153 = vrot.slane %v148, %v152
      %v155 = vadd.f32 %v146, %v153
      %v156 = vadd.f32 %v147, %v153
      %157 = vst.msk [vmem:[#allocation8] sm:$0xff] %vm140, %v155
      %158 = vst.msk [vmem:[#allocation8 + $0x8] sm:$0xff] %vm140, %v156
    $region29: #{tpu_custom_call.1} parent=1 // pred_fallthru
      _
    // Predicated region
    $region30: #{tpu_custom_call.1} parent=1 // pred_check
      _
    $region31: #{tpu_custom_call.1} parent=1 // pred_check_branch
      %160 = sbr.rel (0) target = $region33
    $region32: #{tpu_custom_call.1} parent=1 // pred_region
      %s162 = ssub.s32 256, 256
      %163 = vsyncadd [#allocation5], %s162
      %s164 = sshll.u32 [#allocation8], 4
      %s165 = int_to_ptr.vmem [resolvable:$true] %s164
      %170 = dma.vmem_to_hbm [thread:$0]  %s165, 256, %s3, [#allocation5], 128, 128, 8
    $region33: #{tpu_custom_call.1} parent=1 // pred_fallthru
      _
    // Predicated region
    $region34: #{tpu_custom_call.1} parent=1 // pred_check
      _
    $region35: #{tpu_custom_call.1} parent=1 // pred_check_branch
      %172 = sbr.rel (0) target = $region37
    $region36: #{tpu_custom_call.1} parent=1 // pred_region
      %173 = dma.done [#allocation5], 256
    $region37: #{tpu_custom_call.1} parent=1 // pred_fallthru
      _
    %174 = vsyncpa [#allocation4], 1
    %175 = vsyncpa [#allocation7], 1
    %176 = vsyncpa [#allocation5], 1

</llo_original>
